<compile_context>
chip_gen: v7x
topology: tpu7x:2x2x1
jax: 0.10.0
libtpu: 0.0.40
codegen_flags: <defaults>
</compile_context>

<pallas_src>
import functools

import jax
import jax.numpy as jnp
from jax import lax
from jax.experimental import pallas as pl
from jax.experimental.pallas import tpu as pltpu


def _rdrop_kernel(p1_ref, p2_ref, tgt_ref, out_ref, *, inv_b, kl_coef):
    """Per batch tile: one pre-mixed scalar partial of the final loss.

    out = sum_rows(CE1+CE2) * (1/B) + sum_elems(symKL) * (alpha / (4*B*C))
    """
    p1 = p1_ref[...].astype(jnp.float32)
    p2 = p2_ref[...].astype(jnp.float32)
    tb, C = p1.shape

    # numerically-stable softmax pieces along the class (lane) axis
    m1 = jnp.max(p1, axis=-1, keepdims=True)
    m2 = jnp.max(p2, axis=-1, keepdims=True)
    e1 = jnp.exp(p1 - m1)
    e2 = jnp.exp(p2 - m2)
    s1 = jnp.sum(e1, axis=-1, keepdims=True)
    s2 = jnp.sum(e2, axis=-1, keepdims=True)
    lse1 = m1 + jnp.log(s1)                       # row logsumexp, (tb, 1)
    lse2 = m2 + jnp.log(s2)

    # fused cross entropy: CE1_row + CE2_row = (lse1 + lse2) - (p1+p2)[target]
    col = lax.broadcasted_iota(jnp.int32, (tb, C), 1)
    ce_rows = (lse1 + lse2) - jnp.sum(
        jnp.where(col == tgt_ref[...], p1 + p2, 0.0), axis=-1, keepdims=True)

    # fused symmetric KL (elementwise), without materializing log-softmax:
    #   p2*(ls2-ls1) + p1*(ls1-ls2) == (ls1 - ls2) * (prob1 - prob2)
    #   ls1 - ls2 == (p1 - p2) - (lse1 - lse2)
    # divides hoisted to per-row columns, multiplied per element
    inv_s1 = 1.0 / s1                             # (tb, 1) exact reciprocal
    inv_s2 = 1.0 / s2
    kl_elems = ((p1 - p2) - (lse1 - lse2)) * (e1 * inv_s1 - e2 * inv_s2)

    # single pre-mixed (1,1) partial per grid step
    out_ref[0] = (jnp.sum(ce_rows, keepdims=True) * inv_b
                  + jnp.sum(kl_elems, keepdims=True) * kl_coef)


def _default_vmem_limit_bytes():
    """min(VMEM/2, 64 MiB): ~32 MiB on v7x (64 MiB/TC), 64 MiB on v5e/v6e."""
    try:
        cap = int(pltpu.get_tpu_info().vmem_capacity_bytes)
    except Exception:
        cap = 64 << 20  # conservative fallback (v7x per-TC VMEM)
    return min(cap // 2, 64 << 20)


def _pick_tile_b(B, C, itemsize, vmem_limit_bytes, min_steps=8):
    """Pick a batch tile that (a) fits the VMEM budget including in-kernel
    f32 temporaries, (b) leaves an even, >= min_steps grid when the problem
    is big enough (software pipelining; dual-TC sharding on v7x), and
    (c) short-circuits to a single block for small problems."""
    total_input_bytes = 2 * B * C * itemsize
    # small / ragged batch: one full-array block (skip per-step grid overhead)
    if B % 8 != 0 or total_input_bytes <= (2 << 20):
        return B

    # per-row VMEM footprint:
    #   inputs: 2 arrays x 2 pipeline buffers x C x itemsize
    #   ~6 live (tb, C) f32 in-kernel temporaries
    #   target: (tb, 1) int32 padded to 128 lanes, double-buffered
    per_row = 4 * C * itemsize + 6 * C * 4 + 2 * 128 * 4
    cap_rows = int(0.55 * vmem_limit_bytes) // per_row
    cap_rows = max(8, (cap_rows // 8) * 8)

    divisors = [t for t in range(8, B + 1, 8) if B % t == 0 and t <= cap_rows]
    if not divisors:
        return 8
    even_ok = [t for t in divisors
               if B // t >= min_steps and (B // t) % 2 == 0]
    if even_ok:
        return max(even_ok)
    ok = [t for t in divisors if B // t >= min_steps]
    if ok:
        return max(ok)
    return max(divisors)


def rdrop_loss(pred1, pred2, target, alpha, tile_b=None,
               vmem_limit_bytes=None):
    """R-Drop loss. Pass logits in their producer dtype (keep bf16 as bf16 at
    this boundary — the kernel upcasts to f32 internally). Targets must be
    valid class indices (nn.CrossEntropyLoss's ignore_index=-100 rows are
    NOT excluded)."""
    B, C = pred1.shape
    itemsize = jnp.dtype(pred1.dtype).itemsize
    if vmem_limit_bytes is None:
        vmem_limit_bytes = _default_vmem_limit_bytes()
    if tile_b is None:
        tile_b = _pick_tile_b(B, C, itemsize, vmem_limit_bytes)
    assert B % tile_b == 0, "pad the batch so tile_b divides B"
    num_tiles = B // tile_b
    tgt = target.reshape(B, 1).astype(jnp.int32)

    kernel = functools.partial(
        _rdrop_kernel,
        inv_b=float(1.0 / B),
        kl_coef=float(alpha) / (4.0 * B * C))

    # TODO(synk): for LM-vocab-sized C (32K-256K) add a class-axis grid
    # dimension with an online (flash-style) softmax — required on v7x's
    # 64 MiB VMEM; whole-row blocks are fine for classification-sized C.
    part = pl.pallas_call(
        kernel,
        out_shape=jax.ShapeDtypeStruct((num_tiles, 1, 1), jnp.float32),
        grid_spec=pltpu.PrefetchScalarGridSpec(
            num_scalar_prefetch=0,
            grid=(num_tiles,),
            in_specs=[pl.BlockSpec((tile_b, C), lambda i: (i, 0)),
                      pl.BlockSpec((tile_b, C), lambda i: (i, 0)),
                      pl.BlockSpec((tile_b, 1), lambda i: (i, 0))],
            out_specs=pl.BlockSpec((1, 1, 1), lambda i: (i, 0, 0))),
        compiler_params=pltpu.CompilerParams(
            dimension_semantics=("parallel",),
            vmem_limit_bytes=vmem_limit_bytes),
    )(pred1, pred2, tgt)

    # tiny epilogue: partials are already scaled and mixed in-kernel
    return jnp.sum(part)


def _reference(pred1, pred2, target, alpha):
    """Pure-JAX reference mirroring the PyTorch module."""
    def ce(logits, tgt):
        ls = jax.nn.log_softmax(logits, axis=-1)
        return -jnp.mean(jnp.take_along_axis(ls, tgt[:, None], axis=-1))

    ls1 = jax.nn.log_softmax(pred1, axis=-1)
    ls2 = jax.nn.log_softmax(pred2, axis=-1)
    pr1 = jax.nn.softmax(pred1, axis=-1)
    pr2 = jax.nn.softmax(pred2, axis=-1)
    kl1 = pr2 * (jnp.log(pr2) - ls1)
    kl2 = pr1 * (jnp.log(pr1) - ls2)
    loss_sup = ce(pred1, target) + ce(pred2, target)
    return loss_sup + jnp.mean(kl1 + kl2) / 4.0 * alpha


if __name__ == "__main__":
    # deterministic "module params": alpha from __init__, ce_loss = CE(mean)
    alpha = 4.0
    B, C = 8, 32

    key = jax.random.PRNGKey(0)
    k1, k2, k3 = jax.random.split(key, 3)
    pred1 = jax.random.normal(k1, (B, C), dtype=jnp.float32)
    pred2 = jax.random.normal(k2, (B, C), dtype=jnp.float32)
    target = jax.random.randint(k3, (B,), 0, C, dtype=jnp.int32)

    loss = rdrop_loss(pred1, pred2, target, alpha)
    loss = jax.block_until_ready(loss)

    ref = _reference(pred1, pred2, target, alpha)
    assert jnp.allclose(loss, ref, rtol=1e-5, atol=1e-5), (loss, ref)

    print("KERNEL_OK")
</pallas_src>

<mosaic_0001>
module attributes {stable_mosaic.version = 11 : i64} {
  func.func @_rdrop_kernel(%arg0: i32, %arg1: memref<8x32xf32, #tpu.memory_space<vmem>>, %arg2: memref<8x32xf32, #tpu.memory_space<vmem>>, %arg3: memref<8x1xi32, #tpu.memory_space<vmem>>, %arg4: memref<1x1x1xf32, #tpu.memory_space<vmem>>) attributes {dimension_semantics = [#tpu.dimension_semantics<parallel>], iteration_bounds = array<i64: 1>, scalar_prefetch = 0 : i64, scratch_operands = 0 : i64, tpu.core_type = #tpu.core_type<tc>, window_params = [{transform_indices = @transform_0, window_bounds = array<i64: 8, 32>}, {transform_indices = @transform_1, window_bounds = array<i64: 8, 32>}, {transform_indices = @transform_2, window_bounds = array<i64: 8, 1>}, {transform_indices = @transform_3, window_bounds = array<i64: 1, 1, 1>}]} {
    %c0 = arith.constant 0 : index
    %c0_0 = arith.constant 0 : index
    %0 = vector.load %arg1[%c0, %c0_0] : memref<8x32xf32, #tpu.memory_space<vmem>>, vector<8x32xf32>
    %c0_1 = arith.constant 0 : index
    %c0_2 = arith.constant 0 : index
    %1 = vector.load %arg2[%c0_1, %c0_2] : memref<8x32xf32, #tpu.memory_space<vmem>>, vector<8x32xf32>
    %cst = arith.constant dense<0xFF800000> : vector<8xf32>
    %2 = vector.multi_reduction <maximumf>, %0, %cst [1] : vector<8x32xf32> to vector<8xf32>
    %3 = vector.shape_cast %2 : vector<8xf32> to vector<8x1xf32>
    %cst_3 = arith.constant dense<0xFF800000> : vector<8xf32>
    %4 = vector.multi_reduction <maximumf>, %1, %cst_3 [1] : vector<8x32xf32> to vector<8xf32>
    %5 = vector.shape_cast %4 : vector<8xf32> to vector<8x1xf32>
    %6 = vector.broadcast %3 : vector<8x1xf32> to vector<8x32xf32>
    %7 = arith.subf %0, %6 : vector<8x32xf32>
    %8 = math.exp %7 : vector<8x32xf32>
    %9 = vector.broadcast %5 : vector<8x1xf32> to vector<8x32xf32>
    %10 = arith.subf %1, %9 : vector<8x32xf32>
    %11 = math.exp %10 : vector<8x32xf32>
    %cst_4 = arith.constant dense<0.000000e+00> : vector<8xf32>
    %12 = vector.multi_reduction <add>, %8, %cst_4 [1] : vector<8x32xf32> to vector<8xf32>
    %13 = vector.shape_cast %12 : vector<8xf32> to vector<8x1xf32>
    %cst_5 = arith.constant dense<0.000000e+00> : vector<8xf32>
    %14 = vector.multi_reduction <add>, %11, %cst_5 [1] : vector<8x32xf32> to vector<8xf32>
    %15 = vector.shape_cast %14 : vector<8xf32> to vector<8x1xf32>
    %16 = math.log %13 : vector<8x1xf32>
    %17 = arith.addf %3, %16 : vector<8x1xf32>
    %18 = math.log %15 : vector<8x1xf32>
    %19 = arith.addf %5, %18 : vector<8x1xf32>
    %20 = tpu.iota {dimensions = array<i32: 1>} : vector<8x32xi32>
    %21 = arith.addf %17, %19 : vector<8x1xf32>
    %c0_6 = arith.constant 0 : index
    %c0_7 = arith.constant 0 : index
    %22 = vector.load %arg3[%c0_6, %c0_7] : memref<8x1xi32, #tpu.memory_space<vmem>>, vector<8x1xi32>
    %23 = vector.broadcast %22 : vector<8x1xi32> to vector<8x32xi32>
    %24 = arith.cmpi eq, %20, %23 : vector<8x32xi32>
    %25 = arith.addf %0, %1 : vector<8x32xf32>
    %cst_8 = arith.constant 0.000000e+00 : f32
    %26 = vector.broadcast %cst_8 : f32 to vector<8x32xf32>
    %27 = arith.select %24, %25, %26 : vector<8x32xi1>, vector<8x32xf32>
    %cst_9 = arith.constant dense<0.000000e+00> : vector<8xf32>
    %28 = vector.multi_reduction <add>, %27, %cst_9 [1] : vector<8x32xf32> to vector<8xf32>
    %29 = vector.shape_cast %28 : vector<8xf32> to vector<8x1xf32>
    %30 = arith.subf %21, %29 : vector<8x1xf32>
    %cst_10 = arith.constant 1.000000e+00 : f32
    %31 = vector.broadcast %cst_10 : f32 to vector<8x1xf32>
    %32 = arith.divf %31, %13 : vector<8x1xf32>
    %cst_11 = arith.constant 1.000000e+00 : f32
    %33 = vector.broadcast %cst_11 : f32 to vector<8x1xf32>
    %34 = arith.divf %33, %15 : vector<8x1xf32>
    %35 = arith.subf %0, %1 : vector<8x32xf32>
    %36 = arith.subf %17, %19 : vector<8x1xf32>
    %37 = vector.broadcast %36 : vector<8x1xf32> to vector<8x32xf32>
    %38 = arith.subf %35, %37 : vector<8x32xf32>
    %39 = vector.broadcast %32 : vector<8x1xf32> to vector<8x32xf32>
    %40 = arith.mulf %8, %39 : vector<8x32xf32>
    %41 = vector.broadcast %34 : vector<8x1xf32> to vector<8x32xf32>
    %42 = arith.mulf %11, %41 : vector<8x32xf32>
    %43 = arith.subf %40, %42 : vector<8x32xf32>
    %44 = arith.mulf %38, %43 : vector<8x32xf32>
    %45 = vector.shape_cast %30 : vector<8x1xf32> to vector<1x8x1xf32>
    %cst_12 = arith.constant dense<0.000000e+00> : vector<1xf32>
    %46 = vector.multi_reduction <add>, %45, %cst_12 [1, 2] : vector<1x8x1xf32> to vector<1xf32>
    %47 = vector.shape_cast %46 : vector<1xf32> to vector<1x1x1xf32>
    %48 = vector.extract %47[0, 0, 0] : f32 from vector<1x1x1xf32>
    %49 = vector.broadcast %48 : f32 to vector<1x1xf32>
    %cst_13 = arith.constant 1.250000e-01 : f32
    %50 = vector.broadcast %cst_13 : f32 to vector<1x1xf32>
    %51 = arith.mulf %49, %50 : vector<1x1xf32>
    %52 = vector.shape_cast %44 : vector<8x32xf32> to vector<1x8x32xf32>
    %cst_14 = arith.constant dense<0.000000e+00> : vector<1xf32>
    %53 = vector.multi_reduction <add>, %52, %cst_14 [1, 2] : vector<1x8x32xf32> to vector<1xf32>
    %54 = vector.shape_cast %53 : vector<1xf32> to vector<1x1x1xf32>
    %55 = vector.extract %54[0, 0, 0] : f32 from vector<1x1x1xf32>
    %56 = vector.broadcast %55 : f32 to vector<1x1xf32>
    %cst_15 = arith.constant 3.906250e-03 : f32
    %57 = vector.broadcast %cst_15 : f32 to vector<1x1xf32>
    %58 = arith.mulf %56, %57 : vector<1x1xf32>
    %59 = arith.addf %51, %58 : vector<1x1xf32>
    %c0_16 = arith.constant 0 : index
    %c0_17 = arith.constant 0 : index
    %c0_18 = arith.constant 0 : index
    %60 = vector.load %arg4[%c0_16, %c0_17, %c0_18] : memref<1x1x1xf32, #tpu.memory_space<vmem>>, vector<1x1x1xf32>
    %61 = vector.shape_cast %60 : vector<1x1x1xf32> to vector<1x1xf32>
    %62 = vector.shape_cast %59 : vector<1x1xf32> to vector<1x1x1xf32>
    tpu.vector_store %arg4[%c0_16, %c0_17, %c0_18], %62 {strides = array<i32>} : memref<1x1x1xf32, #tpu.memory_space<vmem>>, vector<1x1x1xf32>,
    return
  }
  func.func @transform_0(%arg0: i32) -> (i32, i32) {
    %c0_i32 = arith.constant 0 : i32
    %c0_i32_0 = arith.constant 0 : i32
    return %arg0, %c0_i32 : i32, i32
  }
  func.func @transform_1(%arg0: i32) -> (i32, i32) {
    %c0_i32 = arith.constant 0 : i32
    %c0_i32_0 = arith.constant 0 : i32
    return %arg0, %c0_i32 : i32, i32
  }
  func.func @transform_2(%arg0: i32) -> (i32, i32) {
    %c0_i32 = arith.constant 0 : i32
    %c0_i32_0 = arith.constant 0 : i32
    return %arg0, %c0_i32 : i32, i32
  }
  func.func @transform_3(%arg0: i32) -> (i32, i32, i32) {
    %c0_i32 = arith.constant 0 : i32
    %c0_i32_0 = arith.constant 0 : i32
    %c0_i32_1 = arith.constant 0 : i32
    return %arg0, %c0_i32, %c0_i32_0 : i32, i32, i32
  }
}

</mosaic_0001>

<llo_original>
// kernel: tpu_custom_call.1
$region0: #{tpu_custom_call.1}
  #allocation0 [shape = 'u32[]', space=smem, size = 0x4, offset = 0x4, fixed_abs, tag = 'smem constant byte address 0x4 - core index']
  #allocation1 [shape = 'u32[144,128]{1,0:T(1,128)}', space=vmem, size = 0x12000, scoped, tag = 'internal scratch']
  %s0 = inlined_call_operand.vmem [shape: f32[8,32], index: 0, kind: input, shape index: {}]
  %s1 = inlined_call_operand.hbm [shape: f32[8,32], index: 1, kind: input, shape index: {}]
  %s2 = inlined_call_operand.vmem [shape: s32[8,1], index: 2, kind: input, shape index: {}]
  %s3 = inlined_call_operand.hbm [shape: f32[1,1,1], index: 3, kind: output, shape index: {}]
  %s4 = sld [smem:[#allocation0]]
  $region26: #{tpu_custom_call.1} parent=0
    _
  %s6 = ssub.s32 1, %s4
  %s7 = scalar_select 0, %s6, %s4
  $region1: #{tpu_custom_call.1} parent=0
    #allocation2 [shape = 'u8[4096]{0}', space=vmem, size = 0x1000, scoped, tag = 'input window, operand 1, single buffered']
    #allocation3 [shape = 's32[1]{0}', space=sflag, size = 0x4, scoped, tag = 'scoped memory for tpu_custom_call.1']
    #allocation4 [shape = 's32[1]{0}', space=sflag, size = 0x4, scoped, tag = 'scoped memory for tpu_custom_call.1']
    #allocation5 [shape = 'u8[512]{0}', space=vmem, size = 0x400, scoped, tag = 'output window, operand 0, single buffered']
    %8 = vsyncpa [#allocation3], 0
    %9 = vsyncpa [#allocation4], 0
    // Predicated region
    $region2: #{tpu_custom_call.1} parent=1 // pred_check
      _
    $region3: #{tpu_custom_call.1} parent=1 // pred_check_branch
      %11 = sbr.rel (0) target = $region5
    $region4: #{tpu_custom_call.1} parent=1 // pred_region
      _
    $region5: #{tpu_custom_call.1} parent=1 // pred_fallthru
      _
    // Predicated region
    $region6: #{tpu_custom_call.1} parent=1 // pred_check
      _
    $region7: #{tpu_custom_call.1} parent=1 // pred_check_branch
      %13 = sbr.rel (0) target = $region9
    $region8: #{tpu_custom_call.1} parent=1 // pred_region
      %s15 = ssub.s32 128, 128
      %16 = vsyncadd [#allocation3], %s15
      %s18 = sshll.u32 [#allocation2], 4
      %s19 = int_to_ptr.vmem [resolvable:$true] %s18
      %21 = dma.hbm_to_vmem [thread:$0]  %s1, 128, %s19, [#allocation3]
    $region9: #{tpu_custom_call.1} parent=1 // pred_fallthru
      _
    // Predicated region
    $region10: #{tpu_custom_call.1} parent=1 // pred_check
      _
    $region11: #{tpu_custom_call.1} parent=1 // pred_check_branch
      %23 = sbr.rel (0) target = $region13
    $region12: #{tpu_custom_call.1} parent=1 // pred_region
      _
    $region13: #{tpu_custom_call.1} parent=1 // pred_fallthru
      _
    // Predicated region
    $region14: #{tpu_custom_call.1} parent=1 // pred_check
      _
    $region15: #{tpu_custom_call.1} parent=1 // pred_check_branch
      %25 = sbr.rel (0) target = $region17
    $region16: #{tpu_custom_call.1} parent=1 // pred_region
      %26 = dma.done [#allocation3], 128
    $region17: #{tpu_custom_call.1} parent=1 // pred_fallthru
      _
    %v27 = vld [vmem:[%s0] sm:$0xff]
    %v28 = vld [vmem:[#allocation2] sm:$0xff]
    %vm29 = vcmask 261120
    %v30 = vsel %vm29, %v27, -inf
    %31 = vmax.xlane.f32.xlu0 %v30
    %v32 = vpop.xlane.xlu0 %31
    %v33 = vsel %vm29, %v28, -inf
    %34 = vmax.xlane.f32.xlu0 %v33
    %v35 = vpop.xlane.xlu0 %34
    %v36 = vsub.f32 %v27, %v32
    %v37 = vmul.f32 %v36, 1.442695
    %v38 = vpow.pop %v37
    %v39 = vsub.f32 %v28, %v35
    %v40 = vmul.f32 %v39, 1.442695
    %v41 = vpow.pop %v40
    %v42 = vsel %vm29, %v38, 0.0
    %43 = vadd.xlane.f32.xlu0 %v42
    %v44 = vpop.xlane.xlu0 %43
    %v45 = vsel %vm29, %v41, 0.0
    %46 = vadd.xlane.f32.xlu0 %v45
    %v47 = vpop.xlane.xlu0 %46
    %v48 = vlog2.pop %v44
    %v49 = vmul.f32 %v48, 0.6931472
    %v50 = vadd.f32 %v32, %v49
    %v51 = vlog2.pop %v47
    %v52 = vmul.f32 %v51, 0.6931472
    %v53 = vadd.f32 %v35, %v52
    %v54 = vlaneseq
    %v55 = vand.u32 %v54, 127
    %v56 = vadd.f32 %v50, %v53
    %v57 = vld [vmem:[%s2] sm:$0xff]
    %58 = vset.pattern.permute.xlu0 0
    %59 = vperm.xlu0 %58, %v57
    %v60 = vpop.permute.xlu0 %59
    %vm61 = vcmp.eq.s32.totalorder %v55, %v60
    %v62 = vadd.f32 %v27, %v28
    %v63 = vsel %vm61, %v62, 0.0
    %v64 = vsel %vm29, %v63, 0.0
    %65 = vadd.xlane.f32.xlu0 %v64
    %v66 = vpop.xlane.xlu0 %65
    %v67 = vsub.f32 %v56, %v66
    %v68 = vrcp.pop %v44
    %v69 = vmul.f32 1.0, %v68
    %v70 = vrcp.pop %v47
    %v71 = vmul.f32 1.0, %v70
    %v72 = vsub.f32 %v27, %v28
    %v73 = vsub.f32 %v50, %v53
    %v74 = vsub.f32 %v72, %v73
    %v75 = vmul.f32 %v38, %v69
    %v76 = vmul.f32 %v41, %v71
    %v77 = vsub.f32 %v75, %v76
    %v78 = vmul.f32 %v74, %v77
    %vm79 = vcmask 7168
    %v80 = vsel %vm79, %v67, 0.0
    %81 = vadd.xlane.f32.xlu0 %v80
    %v82 = vpop.xlane.xlu0 %81
    %v83 = vrot.slane %v82, 4
    %v84 = vadd.f32 %v82, %v83
    %v85 = vrot.slane %v84, 2
    %v86 = vadd.f32 %v84, %v85
    %v87 = vrot.slane %v86, 1
    %v88 = vadd.f32 %v86, %v87
    %s89 = vtos %v88
    %v90 = vstv %s89
    %v91 = vmul.f32 %v90, 0.125
    %v92 = vsel %vm29, %v78, 0.0
    %93 = vadd.xlane.f32.xlu0 %v92
    %v94 = vpop.xlane.xlu0 %93
    %v95 = vrot.slane %v94, 4
    %v96 = vadd.f32 %v94, %v95
    %v97 = vrot.slane %v96, 2
    %v98 = vadd.f32 %v96, %v97
    %v99 = vrot.slane %v98, 1
    %v100 = vadd.f32 %v98, %v99
    %s101 = vtos %v100
    %v102 = vstv %s101
    %v103 = vmul.f32 %v102, 0.00390625
    %v104 = vadd.f32 %v91, %v103
    %vm105 = vcmask 0
    %106 = vst.msk [vmem:[#allocation5] sm:$0x1] %vm105, %v104
    // Predicated region
    $region18: #{tpu_custom_call.1} parent=1 // pred_check
      _
    $region19: #{tpu_custom_call.1} parent=1 // pred_check_branch
      %108 = sbr.rel (0) target = $region21
    $region20: #{tpu_custom_call.1} parent=1 // pred_region
      %s110 = ssub.s32 16, 16
      %111 = vsyncadd [#allocation4], %s110
      %s113 = sshll.u32 [#allocation5], 4
      %s114 = int_to_ptr.vmem [resolvable:$true] %s113
      %116 = dma.vmem_to_hbm [thread:$0]  %s114, 16, %s3, [#allocation4]
    $region21: #{tpu_custom_call.1} parent=1 // pred_fallthru
      _
    // Predicated region
    $region22: #{tpu_custom_call.1} parent=1 // pred_check
      _
    $region23: #{tpu_custom_call.1} parent=1 // pred_check_branch
      %118 = sbr.rel (0) target = $region25
    $region24: #{tpu_custom_call.1} parent=1 // pred_region
      %119 = dma.done [#allocation4], 16
    $region25: #{tpu_custom_call.1} parent=1 // pred_fallthru
      _
    %120 = vsyncpa [#allocation3], 1
    %121 = vsyncpa [#allocation4], 1

</llo_original>
